<compile_context>
chip_gen: v5e
topology: v5e:2x2
jax: 0.10.0
libtpu: 0.0.40
codegen_flags: <defaults>
</compile_context>

<pallas_src>
import functools

import jax
import jax.numpy as jnp
from jax import lax
from jax.experimental import pallas as pl
from jax.experimental.pallas import tpu as pltpu


def _attention_gate_kernel(g_ref, x_ref, wg_ref, wx_ref, b_ref, wpsi_ref,
                           bpsi_ref, out_ref, *, sub_tile, gate_lowp):
    """Channel-major tiles; pixels on the lane axis (lane-dense I/O).

      g_ref:    (B, F_g,  TP)   gating-signal tile
      x_ref:    (B, F_l,  TP)   skip-connection tile
      wg_ref:   (F_int, F_g)    1x1 conv weight, BN folded
      wx_ref:   (F_int, F_l)    1x1 conv weight, BN folded
      b_ref:    (F_int, 1)      combined bias (bg + bx), BN folded, f32
      wpsi_ref: (1, F_int)      psi 1x1 conv weight, BN folded
      bpsi_ref: (1, 1)          psi bias, BN folded, f32
      out_ref:  (B, F_l, TP)
    """
    B = g_ref.shape[0]
    tile = g_ref.shape[-1]
    n_sub = max(1, tile // sub_tile)

    wg = wg_ref[...]
    wx = wx_ref[...]
    bias = b_ref[...]
    wpsi = wpsi_ref[...]
    bpsi = bpsi_ref[...]
    out_dtype = out_ref.dtype

    def compute(g, x):
        # W_g(g) + W_x(x) + b  ->  (F_int, sub); f32 accumulation on the MXU.
        h = jnp.dot(wg, g, preferred_element_type=jnp.float32)
        h = h + jnp.dot(wx, x, preferred_element_type=jnp.float32)
        h = jnp.maximum(h + bias, 0.0)                       # ReLU
        # psi: (1, F_int) @ (F_int, sub) -> lane-dense (1, sub) attention map.
        s = jnp.dot(wpsi, h.astype(wpsi.dtype),
                    preferred_element_type=jnp.float32)
        s = jax.nn.sigmoid(s + bpsi)
        if gate_lowp:
            # bf16 gate multiply (v6e/v7x VALU): halves VPU work + vreg slab.
            return (x * s.astype(x.dtype)).astype(out_dtype)
        return (x.astype(jnp.float32) * s).astype(out_dtype)

    for b in range(B):                      # static, small batch chunk
        if n_sub == 1:
            out_ref[b] = compute(g_ref[b], x_ref[b])
        else:
            def body(c, _, b=b):
                off = pl.multiple_of(c * sub_tile, 128)
                sl = pl.ds(off, sub_tile)
                out_ref[b, :, sl] = compute(g_ref[b, :, sl], x_ref[b, :, sl])
                return 0

            lax.fori_loop(0, n_sub, body, 0, unroll=min(n_sub, 8))


def _fold_bn(w, b, gamma, beta, mean, var, eps=1e-5):
    """Fold eval-mode BatchNorm into a preceding 1x1 conv.

    w: (C_out, C_in), b: (C_out,).  Returns (w_folded, b_folded) in the same
    (C_out, C_in) orientation (kernel computes W @ pixels).
    """
    scale = gamma / jnp.sqrt(var + eps)                  # (C_out,)
    w_f = w * scale[:, None]                             # (C_out, C_in)
    b_f = b * scale + (beta - mean * scale)              # (C_out,)
    return w_f, b_f


def _chip_config():
    """Generation-aware VMEM limits / tile budgets / core counts."""
    try:
        kind = jax.devices()[0].device_kind.lower()
    except Exception:
        kind = ""
    if "v7" in kind:
        # 64 MiB VMEM per TensorCore, 2 TCs/chip, bf16 VALU.
        return dict(vmem_limit=40 << 20, budget=30 << 20, num_cores=2,
                    lowp_valu=True)
    if ("v5e" in kind) or ("v5 lite" in kind) or ("v5lite" in kind):
        # 128 MiB VMEM, 1 TC, no bf16 VALU.
        return dict(vmem_limit=100 << 20, budget=64 << 20, num_cores=1,
                    lowp_valu=False)
    if "v6" in kind:
        # 128 MiB VMEM, 1 TC, bf16 VALU.
        return dict(vmem_limit=100 << 20, budget=64 << 20, num_cores=1,
                    lowp_valu=True)
    # Unknown chip: conservative numbers that are safe everywhere.
    return dict(vmem_limit=48 << 20, budget=28 << 20, num_cores=1,
                lowp_valu=True)


def _round_down_128(v):
    return max(128, (v // 128) * 128)


def _cdiv(a, b):
    return -(-a // b)


def _pick_blocking(N, HW, F_g, F_l, F_int, in_itemsize, out_itemsize,
                   budget_bytes, num_cores, max_tile=16384):
    """Choose (batch_chunk, pixel_tile): per-step DMAs as large as the VMEM
    budget allows while keeping every TensorCore fed."""
    # Double-buffered g/x inputs + double-buffered output, per pixel column.
    per_col = 2 * (F_g + F_l) * in_itemsize + 2 * F_l * out_itemsize
    # Weights/biases + the (<=512 KiB) f32 h sub-chunk + slack.
    reserve = 4 * F_int * (F_g + F_l + 2) + (4 << 20)
    budget_cols = max(128, (budget_bytes - reserve) // max(per_col, 1))

    if HW > min(budget_cols, max_tile):
        # Large spatial extent: tile the pixel axis, one image per grid step.
        tile = min(_round_down_128(min(budget_cols, max_tile)), HW)
        if num_cores > 1 and N * _cdiv(HW, tile) < num_cores:
            # Don't let one giant tile starve the second TensorCore.
            tile = min(tile, _round_down_128(_cdiv(HW, num_cores) + 127))
        return 1, max(128, tile)

    # Small spatial extent (deep UNet levels): whole image per step, fold
    # batch elements together so each step still moves a sizeable DMA.
    b_chunk = max(1, min(N, budget_cols // max(HW, 1)))
    while b_chunk > 1 and _cdiv(N, b_chunk) < num_cores:
        b_chunk -= 1
    return b_chunk, HW


def _pick_sub_tile(tile, F_int, target_bytes=512 * 1024):
    """Largest lane sub-chunk (multiple of 128, dividing the tile) keeping the
    f32 (F_int, sub) intermediate under ~target_bytes (vreg-friendly)."""
    cap = max(128, (target_bytes // (4 * max(F_int, 1))) // 128 * 128)
    if tile <= cap or tile % 128 != 0:
        return tile
    m = tile // 128
    best = 1
    for k in range(1, cap // 128 + 1):
        if m % k == 0:
            best = k
    return best * 128


def attention_gate(g, x, params, *, tile_hw=None, batch_chunk=None):
    """g: (N, F_g, H, W), x: (N, F_l, H, W)  ->  (N, F_l, H, W)."""
    N, F_g, H, W = g.shape
    Nx, F_l, Hx, Wx = x.shape
    assert (N, H, W) == (Nx, Hx, Wx)
    HW = H * W

    wg, bg = _fold_bn(params["wg"], params["bg"], params["bn_g_gamma"],
                      params["bn_g_beta"], params["bn_g_mean"], params["bn_g_var"])
    wx, bx = _fold_bn(params["wx"], params["bx"], params["bn_x_gamma"],
                      params["bn_x_beta"], params["bn_x_mean"], params["bn_x_var"])
    wpsi, bpsi = _fold_bn(params["wpsi"], params["bpsi"], params["bn_p_gamma"],
                          params["bn_p_beta"], params["bn_p_mean"], params["bn_p_var"])
    F_int = wg.shape[0]

    cfg = _chip_config()
    lowp_in = (x.dtype == jnp.bfloat16) or (x.dtype == jnp.float16)

    # NCHW -> (N, C, H*W): a free reshape, no transposes / extra HBM traffic.
    g3 = g.reshape(N, F_g, HW)
    x3 = x.reshape(N, F_l, HW)

    # Match streamed-operand dtype so bf16 inputs hit the MXU as bf16.
    wg_c = wg.astype(g.dtype)
    wx_c = wx.astype(x.dtype)
    wpsi_c = wpsi.reshape(1, F_int).astype(x.dtype if lowp_in else jnp.float32)
    b_gx = (bg + bx).astype(jnp.float32).reshape(F_int, 1)
    bpsi2 = bpsi.astype(jnp.float32).reshape(1, 1)

    if batch_chunk is None or tile_hw is None:
        auto_b, auto_t = _pick_blocking(N, HW, F_g, F_l, F_int,
                                        g3.dtype.itemsize, x3.dtype.itemsize,
                                        cfg["budget"], cfg["num_cores"])
        if batch_chunk is None:
            batch_chunk = auto_b
        if tile_hw is None:
            tile_hw = auto_t
    batch_chunk = max(1, min(batch_chunk, N))
    tile_hw = max(1, min(tile_hw, HW))

    sub_tile = _pick_sub_tile(tile_hw, F_int)
    gate_lowp = cfg["lowp_valu"] and lowp_in

    grid = (pl.cdiv(N, batch_chunk), pl.cdiv(HW, tile_hw))

    kernel = functools.partial(_attention_gate_kernel,
                               sub_tile=sub_tile, gate_lowp=gate_lowp)

    out3 = pl.pallas_call(
        kernel,
        out_shape=jax.ShapeDtypeStruct((N, F_l, HW), x.dtype),
        grid_spec=pltpu.PrefetchScalarGridSpec(
            num_scalar_prefetch=0,
            grid=grid,
            in_specs=[
                pl.BlockSpec((batch_chunk, F_g, tile_hw), lambda n, p: (n, 0, p)),
                pl.BlockSpec((batch_chunk, F_l, tile_hw), lambda n, p: (n, 0, p)),
                pl.BlockSpec((F_int, F_g), lambda n, p: (0, 0)),
                pl.BlockSpec((F_int, F_l), lambda n, p: (0, 0)),
                pl.BlockSpec((F_int, 1), lambda n, p: (0, 0)),
                pl.BlockSpec((1, F_int), lambda n, p: (0, 0)),
                pl.BlockSpec((1, 1), lambda n, p: (0, 0)),
            ],
            out_specs=pl.BlockSpec((batch_chunk, F_l, tile_hw),
                                   lambda n, p: (n, 0, p)),
        ),
        compiler_params=pltpu.CompilerParams(
            dimension_semantics=("parallel", "parallel"),
            vmem_limit_bytes=cfg["vmem_limit"],
        ),
    )(g3, x3, wg_c, wx_c, b_gx, wpsi_c, bpsi2)

    return out3.reshape(N, F_l, H, W)


def init_params(key, F_g, F_l, F_int):
    ks = jax.random.split(key, 9)
    return {
        "wg": jax.random.normal(ks[0], (F_int, F_g), jnp.float32) * 0.1,
        "bg": jax.random.normal(ks[1], (F_int,), jnp.float32) * 0.1,
        "wx": jax.random.normal(ks[2], (F_int, F_l), jnp.float32) * 0.1,
        "bx": jax.random.normal(ks[3], (F_int,), jnp.float32) * 0.1,
        "wpsi": jax.random.normal(ks[4], (1, F_int), jnp.float32) * 0.1,
        "bpsi": jax.random.normal(ks[5], (1,), jnp.float32) * 0.1,
        # BatchNorm (eval-mode) params / running stats
        "bn_g_gamma": jnp.ones((F_int,), jnp.float32) * 1.1,
        "bn_g_beta": jnp.full((F_int,), 0.05, jnp.float32),
        "bn_g_mean": jax.random.normal(ks[6], (F_int,), jnp.float32) * 0.1,
        "bn_g_var": jnp.ones((F_int,), jnp.float32),
        "bn_x_gamma": jnp.ones((F_int,), jnp.float32) * 0.9,
        "bn_x_beta": jnp.full((F_int,), -0.05, jnp.float32),
        "bn_x_mean": jax.random.normal(ks[7], (F_int,), jnp.float32) * 0.1,
        "bn_x_var": jnp.ones((F_int,), jnp.float32) * 1.2,
        "bn_p_gamma": jnp.ones((1,), jnp.float32),
        "bn_p_beta": jnp.zeros((1,), jnp.float32),
        "bn_p_mean": jax.random.normal(ks[8], (1,), jnp.float32) * 0.1,
        "bn_p_var": jnp.ones((1,), jnp.float32),
    }


def attention_gate_ref(g, x, params):
    """Pure-JAX reference (same eval-mode BN semantics), stays in NCHW."""
    wg, bg = _fold_bn(params["wg"], params["bg"], params["bn_g_gamma"],
                      params["bn_g_beta"], params["bn_g_mean"], params["bn_g_var"])
    wx, bx = _fold_bn(params["wx"], params["bx"], params["bn_x_gamma"],
                      params["bn_x_beta"], params["bn_x_mean"], params["bn_x_var"])
    wpsi, bpsi = _fold_bn(params["wpsi"], params["bpsi"], params["bn_p_gamma"],
                          params["bn_p_beta"], params["bn_p_mean"], params["bn_p_var"])
    g1 = jnp.einsum("oc,nchw->nohw", wg, g) + bg[None, :, None, None]
    x1 = jnp.einsum("oc,nchw->nohw", wx, x) + bx[None, :, None, None]
    p = jax.nn.relu(g1 + x1)
    s = jax.nn.sigmoid(jnp.einsum("oc,nchw->nohw", wpsi, p)
                       + bpsi[None, :, None, None])
    return (x * s).astype(x.dtype)


if __name__ == "__main__":
    # Small shapes: batch=2, F_g=8, F_l=4, F_int=16, spatial=16x16.
    N, F_g, F_l, F_int, H, W = 2, 8, 4, 16, 16, 16
    key = jax.random.PRNGKey(0)
    kg, kx, kp = jax.random.split(key, 3)

    g = jax.random.normal(kg, (N, F_g, H, W), jnp.float32)
    x = jax.random.normal(kx, (N, F_l, H, W), jnp.float32)
    params = init_params(kp, F_g, F_l, F_int)

    out = attention_gate(g, x, params)
    out = jax.block_until_ready(out)

    ref = attention_gate_ref(g, x, params)
    assert out.shape == (N, F_l, H, W)
    assert jnp.allclose(out, ref, atol=2e-5, rtol=2e-5), "mismatch vs JAX reference"

    print("KERNEL_OK")
</pallas_src>

<mosaic_0001>
module attributes {stable_mosaic.version = 11 : i64} {
  func.func @_attention_gate_kernel(%arg0: i32, %arg1: i32, %arg2: memref<2x8x256xf32, #tpu.memory_space<vmem>>, %arg3: memref<2x4x256xf32, #tpu.memory_space<vmem>>, %arg4: memref<16x8xf32, #tpu.memory_space<vmem>>, %arg5: memref<16x4xf32, #tpu.memory_space<vmem>>, %arg6: memref<16x1xf32, #tpu.memory_space<vmem>>, %arg7: memref<1x16xf32, #tpu.memory_space<vmem>>, %arg8: memref<1x1xf32, #tpu.memory_space<vmem>>, %arg9: memref<2x4x256xf32, #tpu.memory_space<vmem>>) attributes {dimension_semantics = [#tpu.dimension_semantics<parallel>, #tpu.dimension_semantics<parallel>], iteration_bounds = array<i64: 1, 1>, scalar_prefetch = 0 : i64, scratch_operands = 0 : i64, tpu.core_type = #tpu.core_type<tc>, window_params = [{transform_indices = @transform_0, window_bounds = array<i64: 2, 8, 256>}, {transform_indices = @transform_1, window_bounds = array<i64: 2, 4, 256>}, {pipeline_mode = #tpu.pipeline_mode<synchronous>, transform_indices = @transform_2, window_bounds = array<i64: 16, 8>}, {pipeline_mode = #tpu.pipeline_mode<synchronous>, transform_indices = @transform_3, window_bounds = array<i64: 16, 4>}, {pipeline_mode = #tpu.pipeline_mode<synchronous>, transform_indices = @transform_4, window_bounds = array<i64: 16, 1>}, {pipeline_mode = #tpu.pipeline_mode<synchronous>, transform_indices = @transform_5, window_bounds = array<i64: 1, 16>}, {pipeline_mode = #tpu.pipeline_mode<synchronous>, transform_indices = @transform_6, window_bounds = array<i64: 1, 1>}, {transform_indices = @transform_7, window_bounds = array<i64: 2, 4, 256>}]} {
    %c0 = arith.constant 0 : index
    %c0_0 = arith.constant 0 : index
    %0 = vector.load %arg4[%c0, %c0_0] : memref<16x8xf32, #tpu.memory_space<vmem>>, vector<16x8xf32>
    %c0_1 = arith.constant 0 : index
    %c0_2 = arith.constant 0 : index
    %1 = vector.load %arg5[%c0_1, %c0_2] : memref<16x4xf32, #tpu.memory_space<vmem>>, vector<16x4xf32>
    %c0_3 = arith.constant 0 : index
    %c0_4 = arith.constant 0 : index
    %2 = vector.load %arg6[%c0_3, %c0_4] : memref<16x1xf32, #tpu.memory_space<vmem>>, vector<16x1xf32>
    %c0_5 = arith.constant 0 : index
    %c0_6 = arith.constant 0 : index
    %3 = vector.load %arg7[%c0_5, %c0_6] : memref<1x16xf32, #tpu.memory_space<vmem>>, vector<1x16xf32>
    %c0_7 = arith.constant 0 : index
    %c0_8 = arith.constant 0 : index
    %4 = vector.load %arg8[%c0_7, %c0_8] : memref<1x1xf32, #tpu.memory_space<vmem>>, vector<1x1xf32>
    %c0_9 = arith.constant 0 : index
    %c0_10 = arith.constant 0 : index
    %c0_11 = arith.constant 0 : index
    %5 = vector.load %arg2[%c0_9, %c0_10, %c0_11] : memref<2x8x256xf32, #tpu.memory_space<vmem>>, vector<1x8x256xf32>
    %6 = vector.shape_cast %5 : vector<1x8x256xf32> to vector<8x256xf32>
    %c0_12 = arith.constant 0 : index
    %c0_13 = arith.constant 0 : index
    %c0_14 = arith.constant 0 : index
    %7 = vector.load %arg3[%c0_12, %c0_13, %c0_14] : memref<2x4x256xf32, #tpu.memory_space<vmem>>, vector<1x4x256xf32>
    %8 = vector.shape_cast %7 : vector<1x4x256xf32> to vector<4x256xf32>
    %cst = arith.constant dense<0.000000e+00> : vector<16x256xf32>
    %9 = tpu.matmul %0, %6, %cst {dimension_numbers = #tpu.dot_dimension_numbers<[1], [0], [0], [1], [0, 0, 1, 1], [], []>} : vector<16x8xf32>, vector<8x256xf32>, vector<16x256xf32> -> vector<16x256xf32>
    %cst_15 = arith.constant dense<0.000000e+00> : vector<16x256xf32>
    %10 = tpu.matmul %1, %8, %cst_15 {dimension_numbers = #tpu.dot_dimension_numbers<[1], [0], [0], [1], [0, 0, 1, 1], [], []>} : vector<16x4xf32>, vector<4x256xf32>, vector<16x256xf32> -> vector<16x256xf32>
    %11 = arith.addf %9, %10 : vector<16x256xf32>
    %12 = vector.broadcast %2 : vector<16x1xf32> to vector<16x256xf32>
    %13 = arith.addf %11, %12 : vector<16x256xf32>
    %cst_16 = arith.constant 0.000000e+00 : f32
    %14 = vector.broadcast %cst_16 : f32 to vector<16x256xf32>
    %15 = arith.maximumf %13, %14 : vector<16x256xf32>
    %cst_17 = arith.constant dense<0.000000e+00> : vector<1x256xf32>
    %16 = tpu.matmul %3, %15, %cst_17 {dimension_numbers = #tpu.dot_dimension_numbers<[1], [0], [0], [1], [0, 0, 1, 1], [], []>} : vector<1x16xf32>, vector<16x256xf32>, vector<1x256xf32> -> vector<1x256xf32>
    %17 = vector.broadcast %4 : vector<1x1xf32> to vector<1x256xf32>
    %18 = arith.addf %16, %17 : vector<1x256xf32>
    %19 = arith.negf %18 : vector<1x256xf32>
    %20 = math.exp %19 : vector<1x256xf32>
    %cst_18 = arith.constant 1.000000e+00 : f32
    %21 = vector.broadcast %cst_18 : f32 to vector<1x256xf32>
    %22 = arith.addf %21, %20 : vector<1x256xf32>
    %23 = arith.divf %21, %22 : vector<1x256xf32>
    %24 = vector.broadcast %23 : vector<1x256xf32> to vector<4x256xf32>
    %25 = arith.mulf %8, %24 : vector<4x256xf32>
    %c0_19 = arith.constant 0 : index
    %c0_20 = arith.constant 0 : index
    %c0_21 = arith.constant 0 : index
    %26 = vector.load %arg9[%c0_19, %c0_20, %c0_21] : memref<2x4x256xf32, #tpu.memory_space<vmem>>, vector<1x4x256xf32>
    %27 = vector.shape_cast %26 : vector<1x4x256xf32> to vector<4x256xf32>
    %28 = vector.shape_cast %25 : vector<4x256xf32> to vector<1x4x256xf32>
    tpu.vector_store %arg9[%c0_19, %c0_20, %c0_21], %28 {strides = array<i32>} : memref<2x4x256xf32, #tpu.memory_space<vmem>>, vector<1x4x256xf32>,
    %c1 = arith.constant 1 : index
    %c0_22 = arith.constant 0 : index
    %c0_23 = arith.constant 0 : index
    %29 = vector.load %arg2[%c1, %c0_22, %c0_23] : memref<2x8x256xf32, #tpu.memory_space<vmem>>, vector<1x8x256xf32>
    %30 = vector.shape_cast %29 : vector<1x8x256xf32> to vector<8x256xf32>
    %c1_24 = arith.constant 1 : index
    %c0_25 = arith.constant 0 : index
    %c0_26 = arith.constant 0 : index
    %31 = vector.load %arg3[%c1_24, %c0_25, %c0_26] : memref<2x4x256xf32, #tpu.memory_space<vmem>>, vector<1x4x256xf32>
    %32 = vector.shape_cast %31 : vector<1x4x256xf32> to vector<4x256xf32>
    %cst_27 = arith.constant dense<0.000000e+00> : vector<16x256xf32>
    %33 = tpu.matmul %0, %30, %cst_27 {dimension_numbers = #tpu.dot_dimension_numbers<[1], [0], [0], [1], [0, 0, 1, 1], [], []>} : vector<16x8xf32>, vector<8x256xf32>, vector<16x256xf32> -> vector<16x256xf32>
    %cst_28 = arith.constant dense<0.000000e+00> : vector<16x256xf32>
    %34 = tpu.matmul %1, %32, %cst_28 {dimension_numbers = #tpu.dot_dimension_numbers<[1], [0], [0], [1], [0, 0, 1, 1], [], []>} : vector<16x4xf32>, vector<4x256xf32>, vector<16x256xf32> -> vector<16x256xf32>
    %35 = arith.addf %33, %34 : vector<16x256xf32>
    %36 = vector.broadcast %2 : vector<16x1xf32> to vector<16x256xf32>
    %37 = arith.addf %35, %36 : vector<16x256xf32>
    %cst_29 = arith.constant 0.000000e+00 : f32
    %38 = vector.broadcast %cst_29 : f32 to vector<16x256xf32>
    %39 = arith.maximumf %37, %38 : vector<16x256xf32>
    %cst_30 = arith.constant dense<0.000000e+00> : vector<1x256xf32>
    %40 = tpu.matmul %3, %39, %cst_30 {dimension_numbers = #tpu.dot_dimension_numbers<[1], [0], [0], [1], [0, 0, 1, 1], [], []>} : vector<1x16xf32>, vector<16x256xf32>, vector<1x256xf32> -> vector<1x256xf32>
    %41 = vector.broadcast %4 : vector<1x1xf32> to vector<1x256xf32>
    %42 = arith.addf %40, %41 : vector<1x256xf32>
    %43 = arith.negf %42 : vector<1x256xf32>
    %44 = math.exp %43 : vector<1x256xf32>
    %cst_31 = arith.constant 1.000000e+00 : f32
    %45 = vector.broadcast %cst_31 : f32 to vector<1x256xf32>
    %46 = arith.addf %45, %44 : vector<1x256xf32>
    %47 = arith.divf %45, %46 : vector<1x256xf32>
    %48 = vector.broadcast %47 : vector<1x256xf32> to vector<4x256xf32>
    %49 = arith.mulf %32, %48 : vector<4x256xf32>
    %c1_32 = arith.constant 1 : index
    %c0_33 = arith.constant 0 : index
    %c0_34 = arith.constant 0 : index
    %50 = vector.load %arg9[%c1_32, %c0_33, %c0_34] : memref<2x4x256xf32, #tpu.memory_space<vmem>>, vector<1x4x256xf32>
    %51 = vector.shape_cast %50 : vector<1x4x256xf32> to vector<4x256xf32>
    %52 = vector.shape_cast %49 : vector<4x256xf32> to vector<1x4x256xf32>
    tpu.vector_store %arg9[%c1_32, %c0_33, %c0_34], %52 {strides = array<i32>} : memref<2x4x256xf32, #tpu.memory_space<vmem>>, vector<1x4x256xf32>,
    return
  }
  func.func @transform_0(%arg0: i32, %arg1: i32) -> (i32, i32, i32) {
    %c0_i32 = arith.constant 0 : i32
    %c0_i32_0 = arith.constant 0 : i32
    return %arg0, %c0_i32, %arg1 : i32, i32, i32
  }
  func.func @transform_1(%arg0: i32, %arg1: i32) -> (i32, i32, i32) {
    %c0_i32 = arith.constant 0 : i32
    %c0_i32_0 = arith.constant 0 : i32
    return %arg0, %c0_i32, %arg1 : i32, i32, i32
  }
  func.func @transform_2(%arg0: i32, %arg1: i32) -> (i32, i32) {
    %c0_i32 = arith.constant 0 : i32
    %c0_i32_0 = arith.constant 0 : i32
    %c0_i32_1 = arith.constant 0 : i32
    return %c0_i32, %c0_i32_0 : i32, i32
  }
  func.func @transform_3(%arg0: i32, %arg1: i32) -> (i32, i32) {
    %c0_i32 = arith.constant 0 : i32
    %c0_i32_0 = arith.constant 0 : i32
    %c0_i32_1 = arith.constant 0 : i32
    return %c0_i32, %c0_i32_0 : i32, i32
  }
  func.func @transform_4(%arg0: i32, %arg1: i32) -> (i32, i32) {
    %c0_i32 = arith.constant 0 : i32
    %c0_i32_0 = arith.constant 0 : i32
    %c0_i32_1 = arith.constant 0 : i32
    return %c0_i32, %c0_i32_0 : i32, i32
  }
  func.func @transform_5(%arg0: i32, %arg1: i32) -> (i32, i32) {
    %c0_i32 = arith.constant 0 : i32
    %c0_i32_0 = arith.constant 0 : i32
    %c0_i32_1 = arith.constant 0 : i32
    return %c0_i32, %c0_i32_0 : i32, i32
  }
  func.func @transform_6(%arg0: i32, %arg1: i32) -> (i32, i32) {
    %c0_i32 = arith.constant 0 : i32
    %c0_i32_0 = arith.constant 0 : i32
    %c0_i32_1 = arith.constant 0 : i32
    return %c0_i32, %c0_i32_0 : i32, i32
  }
  func.func @transform_7(%arg0: i32, %arg1: i32) -> (i32, i32, i32) {
    %c0_i32 = arith.constant 0 : i32
    %c0_i32_0 = arith.constant 0 : i32
    return %arg0, %c0_i32, %arg1 : i32, i32, i32
  }
}

</mosaic_0001>

<llo_original>
// kernel: tpu_custom_call.1
$region0: #{tpu_custom_call.1}
  #allocation0 [shape = 'u32[]', space=smem, size = 0x4, offset = 0x4, fixed_abs, tag = 'smem constant byte address 0x4 - core index']
  #allocation1 [shape = 'u32[72,128]{1,0:T(1,128)}', space=vmem, size = 0x9000, scoped, tag = 'internal scratch']
  #allocation2 [shape = 'f32[1,1]{1,0:T(1,128)S(1)}', space=vmem, size = 0x200, scoped, tag = 'scoped memory for tpu_custom_call.1']
  %s0 = inlined_call_operand.vmem [shape: f32[2,8,256], index: 0, kind: input, shape index: {}]
  %s1 = inlined_call_operand.vmem [shape: f32[2,4,256], index: 1, kind: input, shape index: {}]
  %s2 = inlined_call_operand.vmem [shape: f32[16,8], index: 2, kind: input, shape index: {}]
  %s3 = inlined_call_operand.vmem [shape: f32[16,4], index: 3, kind: input, shape index: {}]
  %s4 = inlined_call_operand.vmem [shape: f32[16,1], index: 4, kind: input, shape index: {}]
  %s5 = inlined_call_operand.vmem [shape: f32[1,16], index: 5, kind: input, shape index: {}]
  %s6 = inlined_call_operand.<no memory space> [shape: f32[1,1], index: 6, kind: input, shape index: {}]
  %s7 = inlined_call_operand.hbm [shape: f32[2,4,256], index: 7, kind: output, shape index: {}]
  %s8 = sld [smem:[#allocation0]]
  $region38: #{tpu_custom_call.1} parent=0
    _
  %s10 = ssub.s32 1, %s8
  %s11 = scalar_select 0, %s10, %s8
  %v12 = vstv %s6
  %13 = vst [vmem:[#allocation2] sm:$0x1] %v12
  $region1: #{tpu_custom_call.1} parent=0
    #allocation3 [shape = 'u8[8192]{0}', space=vmem, size = 0x2000, scoped, tag = 'output window, operand 0, single buffered']
    #allocation4 [shape = 's32[1]{0}', space=sflag, size = 0x4, scoped, tag = 'scoped memory for tpu_custom_call.1']
    %14 = vsyncpa [#allocation4], 0
    // Predicated region
    $region2: #{tpu_custom_call.1} parent=1 // pred_check
      _
    $region3: #{tpu_custom_call.1} parent=1 // pred_check_branch
      %16 = sbr.rel (0) target = $region5
    $region4: #{tpu_custom_call.1} parent=1 // pred_region
      _
    $region5: #{tpu_custom_call.1} parent=1 // pred_fallthru
      _
    // Predicated region
    $region6: #{tpu_custom_call.1} parent=1 // pred_check
      _
    $region7: #{tpu_custom_call.1} parent=1 // pred_check_branch
      %18 = sbr.rel (0) target = $region9
    $region8: #{tpu_custom_call.1} parent=1 // pred_region
      _
    $region9: #{tpu_custom_call.1} parent=1 // pred_fallthru
      _
    // Predicated region
    $region10: #{tpu_custom_call.1} parent=1 // pred_check
      _
    $region11: #{tpu_custom_call.1} parent=1 // pred_check_branch
      %20 = sbr.rel (0) target = $region13
    $region12: #{tpu_custom_call.1} parent=1 // pred_region
      _
    $region13: #{tpu_custom_call.1} parent=1 // pred_fallthru
      _
    // Predicated region
    $region14: #{tpu_custom_call.1} parent=1 // pred_check
      _
    $region15: #{tpu_custom_call.1} parent=1 // pred_check_branch
      %22 = sbr.rel (0) target = $region17
    $region16: #{tpu_custom_call.1} parent=1 // pred_region
      _
    $region17: #{tpu_custom_call.1} parent=1 // pred_fallthru
      _
    // Predicated region
    $region18: #{tpu_custom_call.1} parent=1 // pred_check
      _
    $region19: #{tpu_custom_call.1} parent=1 // pred_check_branch
      %24 = sbr.rel (0) target = $region21
    $region20: #{tpu_custom_call.1} parent=1 // pred_region
      _
    $region21: #{tpu_custom_call.1} parent=1 // pred_fallthru
      _
    // Predicated region
    $region22: #{tpu_custom_call.1} parent=1 // pred_check
      _
    $region23: #{tpu_custom_call.1} parent=1 // pred_check_branch
      %26 = sbr.rel (0) target = $region25
    $region24: #{tpu_custom_call.1} parent=1 // pred_region
      _
    $region25: #{tpu_custom_call.1} parent=1 // pred_fallthru
      _
    // Predicated region
    $region26: #{tpu_custom_call.1} parent=1 // pred_check
      _
    $region27: #{tpu_custom_call.1} parent=1 // pred_check_branch
      %28 = sbr.rel (0) target = $region29
    $region28: #{tpu_custom_call.1} parent=1 // pred_region
      _
    $region29: #{tpu_custom_call.1} parent=1 // pred_fallthru
      _
    %v29 = vld [vmem:[%s2] sm:$0xff]
    %v30 = vld [vmem:[%s2 + $0x8] sm:$0xff]
    %v31 = vld [vmem:[%s3] sm:$0xff]
    %v32 = vld [vmem:[%s3 + $0x8] sm:$0xff]
    %v33 = vld [vmem:[%s4] sm:$0xff]
    %v34 = vld [vmem:[%s4 + $0x8] sm:$0xff]
    %v35 = vld [vmem:[%s5] sm:$0x1]
    %v36 = vld [vmem:[#allocation2] sm:$0x1]
    %v37 = vld [vmem:[%s0] sm:$0xff]
    %v38 = vld [vmem:[%s0 + $0x8] sm:$0xff]
    %v39 = vld [vmem:[%s1] sm:$0xff]
    %41 = vst [vmem:[#allocation1] ss:$2 sm:$0xff] %v39
    %v42 = vld.sshfl [vmem:[#allocation1] sm:$0xff pattern:$0x75316420]
    %v43 = vld.sshfl [vmem:[#allocation1 + $0x8] sm:$0xff pattern:$0x75316420]
    %vm44 = vcmask 31744
    %v46 = vsel %vm44, %v31, 0
    %v49 = vsel %vm44, %v32, 0
    %vm51 = vcmask 1043456
    %v52 = vsel %vm51, %v42, 0
    %v54 = vsel %vm51, %v43, 0
    %56 = vmatpush.msra.mxu0 0.0
    %57 = vmatpush.msra.mxu0 0.0
    %58 = vmatpush.msra.mxu0 0.0
    %59 = vmatpush.msra.mxu0 0.0
    %60 = vmatpush.msra.mxu0 0.0
    %61 = vmatpush.msra.mxu0 0.0
    %62 = vmatpush.msra.mxu0 0.0
    %63 = vmatpush.msra.mxu0 0.0
    %64 = vmatpush.msra.mxu0 0.0
    %65 = vmatpush.msra.mxu0 0.0
    %66 = vmatpush.msra.mxu0 0.0
    %67 = vmatpush.msra.mxu0 0.0
    %68 = vmatpush.msra.mxu0 0.0
    %69 = vmatpush.msra.mxu0 0.0
    %70 = vmatpush.msra.mxu0 0.0
    %71 = vmatpush.msra.mxu0 %v52
    %72 = vmatmul.f32.gmra.mxu0 %v46
    %v73 = vpop.f32.mrf.mxu0
    %v74 = vadd.f32 0.0, %v73
    %75 = vmatmul.f32.gmra.mxu0 %v49
    %v76 = vpop.f32.mrf.mxu0
    %v77 = vadd.f32 0.0, %v76
    %78 = vdwg.mxu0
    %79 = vmatpush.msra.mxu0 0.0
    %80 = vmatpush.msra.mxu0 0.0
    %81 = vmatpush.msra.mxu0 0.0
    %82 = vmatpush.msra.mxu0 0.0
    %83 = vmatpush.msra.mxu0 0.0
    %84 = vmatpush.msra.mxu0 0.0
    %85 = vmatpush.msra.mxu0 0.0
    %86 = vmatpush.msra.mxu0 0.0
    %87 = vmatpush.msra.mxu0 0.0
    %88 = vmatpush.msra.mxu0 0.0
    %89 = vmatpush.msra.mxu0 0.0
    %90 = vmatpush.msra.mxu0 0.0
    %91 = vmatpush.msra.mxu0 0.0
    %92 = vmatpush.msra.mxu0 0.0
    %93 = vmatpush.msra.mxu0 0.0
    %94 = vmatpush.msra.mxu0 %v54
    %95 = vmatmul.f32.gmra.mxu0 %v46
    %v96 = vpop.f32.mrf.mxu0
    %v97 = vadd.f32 0.0, %v96
    %98 = vmatmul.f32.gmra.mxu0 %v49
    %v99 = vpop.f32.mrf.mxu0
    %v100 = vadd.f32 0.0, %v99
    %101 = vdwg.mxu0
    %vm102 = vcmask 64512
    %v104 = vsel %vm102, %v29, 0
    %v107 = vsel %vm102, %v30, 0
    %109 = vmatpush.msra.mxu0 0.0
    %110 = vmatpush.msra.mxu0 0.0
    %111 = vmatpush.msra.mxu0 0.0
    %112 = vmatpush.msra.mxu0 0.0
    %113 = vmatpush.msra.mxu0 0.0
    %114 = vmatpush.msra.mxu0 0.0
    %115 = vmatpush.msra.mxu0 0.0
    %116 = vmatpush.msra.mxu0 0.0
    %117 = vmatpush.msra.mxu0 0.0
    %118 = vmatpush.msra.mxu0 0.0
    %119 = vmatpush.msra.mxu0 0.0
    %120 = vmatpush.msra.mxu0 0.0
    %121 = vmatpush.msra.mxu0 0.0
    %122 = vmatpush.msra.mxu0 0.0
    %123 = vmatpush.msra.mxu0 0.0
    %124 = vmatpush.msra.mxu0 %v37
    %125 = vmatmul.f32.gmra.mxu0 %v104
    %v126 = vpop.f32.mrf.mxu0
    %v127 = vadd.f32 %v74, %v126
    %128 = vmatmul.f32.gmra.mxu0 %v107
    %v129 = vpop.f32.mrf.mxu0
    %v130 = vadd.f32 %v77, %v129
    %131 = vdwg.mxu0
    %132 = vmatpush.msra.mxu0 0.0
    %133 = vmatpush.msra.mxu0 0.0
    %134 = vmatpush.msra.mxu0 0.0
    %135 = vmatpush.msra.mxu0 0.0
    %136 = vmatpush.msra.mxu0 0.0
    %137 = vmatpush.msra.mxu0 0.0
    %138 = vmatpush.msra.mxu0 0.0
    %139 = vmatpush.msra.mxu0 0.0
    %140 = vmatpush.msra.mxu0 0.0
    %141 = vmatpush.msra.mxu0 0.0
    %142 = vmatpush.msra.mxu0 0.0
    %143 = vmatpush.msra.mxu0 0.0
    %144 = vmatpush.msra.mxu0 0.0
    %145 = vmatpush.msra.mxu0 0.0
    %146 = vmatpush.msra.mxu0 0.0
    %147 = vmatpush.msra.mxu0 %v38
    %148 = vmatmul.f32.gmra.mxu0 %v104
    %v149 = vpop.f32.mrf.mxu0
    %v150 = vadd.f32 %v97, %v149
    %151 = vmatmul.f32.gmra.mxu0 %v107
    %v152 = vpop.f32.mrf.mxu0
    %v153 = vadd.f32 %v100, %v152
    %154 = vdwg.mxu0
    %156 = vset.pattern.permute.xlu0 0
    %157 = vperm.xlu0 %156, %v33
    %v158 = vpop.permute.xlu0 %157
    %161 = vset.pattern.permute.xlu0 0
    %162 = vperm.xlu0 %161, %v34
    %v163 = vpop.permute.xlu0 %162
    %v165 = vadd.f32 %v127, %v158
    %v166 = vadd.f32 %v150, %v158
    %v167 = vadd.f32 %v130, %v163
    %v168 = vadd.f32 %v153, %v163
    %v169 = vmax.f32 %v165, 0.0
    %v170 = vmax.f32 %v166, 0.0
    %v171 = vmax.f32 %v167, 0.0
    %v172 = vmax.f32 %v168, 0.0
    %174 = vset.pattern.permute.xlu0 0
    %175 = vperm.xlu0 %174, %v36
    %v176 = vpop.permute.xlu0 %175
    %v178 = vperm.slane %v176, 0
    %vm179 = vcmask 130048
    %v181 = vsel %vm179, %v35, 0
    %183 = vmatpush.msra.mxu0 0.0
    %184 = vmatpush.msra.mxu0 0.0
    %185 = vmatpush.msra.mxu0 0.0
    %186 = vmatpush.msra.mxu0 0.0
    %187 = vmatpush.msra.mxu0 0.0
    %188 = vmatpush.msra.mxu0 0.0
    %189 = vmatpush.msra.mxu0 0.0
    %190 = vmatpush.msra.mxu0 0.0
    %191 = vmatpush.msra.mxu0 0.0
    %192 = vmatpush.msra.mxu0 0.0
    %193 = vmatpush.msra.mxu0 0.0
    %194 = vmatpush.msra.mxu0 0.0
    %195 = vmatpush.msra.mxu0 0.0
    %196 = vmatpush.msra.mxu0 0.0
    %197 = vmatpush.msra.mxu0 %v171
    %198 = vmatpush.msra.mxu0 %v169
    %199 = vmatmul.f32.gmra.mxu0 %v181
    %v200 = vpop.f32.mrf.mxu0
    %v201 = vadd.f32 %v178, %v200
    %202 = vdwg.mxu0
    %203 = vmatpush.msra.mxu0 0.0
    %204 = vmatpush.msra.mxu0 0.0
    %205 = vmatpush.msra.mxu0 0.0
    %206 = vmatpush.msra.mxu0 0.0
    %207 = vmatpush.msra.mxu0 0.0
    %208 = vmatpush.msra.mxu0 0.0
    %209 = vmatpush.msra.mxu0 0.0
    %210 = vmatpush.msra.mxu0 0.0
    %211 = vmatpush.msra.mxu0 0.0
    %212 = vmatpush.msra.mxu0 0.0
    %213 = vmatpush.msra.mxu0 0.0
    %214 = vmatpush.msra.mxu0 0.0
    %215 = vmatpush.msra.mxu0 0.0
    %216 = vmatpush.msra.mxu0 0.0
    %217 = vmatpush.msra.mxu0 %v172
    %218 = vmatpush.msra.mxu0 %v170
    %219 = vmatmul.f32.gmra.mxu0 %v181
    %v220 = vpop.f32.mrf.mxu0
    %v221 = vadd.f32 %v178, %v220
    %222 = vdwg.mxu0
    %v223 = vxor.u32 %v201, 2147483648
    %v224 = vxor.u32 %v221, 2147483648
    %v225 = vmul.f32 %v223, 1.442695
    %v226 = vpow.pop %v225
    %v227 = vmul.f32 %v224, 1.442695
    %v228 = vpow.pop %v227
    %v229 = vadd.f32 %v226, 1.0
    %v230 = vadd.f32 %v228, 1.0
    %v231 = vrcp.pop %v229
    %v232 = vmul.f32 %v229, %v231
    %v233 = vsub.f32 1.0, %v232
    %v234 = vmul.f32 %v231, %v233
    %v235 = vadd.f32 %v231, %v234
    %vm236 = vweird.f32 %v229
    %vm237 = vweird.f32 %v231
    %vm238 = vmor %vm236, %vm237
    %v239 = vsel %vm238, %v231, %v235
    %v240 = vand.u32 2147483647, %v229
    %vm241 = vcmp.eq.f32.partialorder %v240, 8.507059e+37
    %v242 = vand.u32 %v229, 2147483648
    %v243 = vor.u32 1.1754944e-38, %v242
    %v244 = vsel %vm241, %v243, %v239
    %v245 = vmul.f32 1.0, %v244
    %v246 = vrcp.pop %v230
    %v247 = vmul.f32 %v230, %v246
    %v248 = vsub.f32 1.0, %v247
    %v249 = vmul.f32 %v246, %v248
    %v250 = vadd.f32 %v246, %v249
    %vm251 = vweird.f32 %v230
    %vm252 = vweird.f32 %v246
    %vm253 = vmor %vm251, %vm252
    %v254 = vsel %vm253, %v246, %v250
    %v255 = vand.u32 2147483647, %v230
    %vm256 = vcmp.eq.f32.partialorder %v255, 8.507059e+37
    %v257 = vand.u32 %v230, 2147483648
    %v258 = vor.u32 1.1754944e-38, %v257
    %v259 = vsel %vm256, %v258, %v254
    %v260 = vmul.f32 1.0, %v259
    %v261 = vperm.slane %v245, 0
    %v262 = vperm.slane %v260, 0
    %v265 = vrot.slane %v262, 4
    %v266 = vsel %vm51, %v261, %v265
    %v268 = vmul.f32 %v39, %v266
    %269 = vst [vmem:[#allocation3] sm:$0xff] %v268
    %s270 = scalar_lea.vmem %s0, 16
    %v271 = vld [vmem:[%s270] sm:$0xff]
    %v272 = vld [vmem:[%s270 + $0x8] sm:$0xff]
    %s273 = scalar_lea.vmem %s1, 8
    %v274 = vld [vmem:[%s273] sm:$0xff]
    %276 = vst [vmem:[#allocation1] ss:$2 sm:$0xff] %v274
    %v277 = vld.sshfl [vmem:[#allocation1] sm:$0xff pattern:$0x75316420]
    %v278 = vld.sshfl [vmem:[#allocation1 + $0x8] sm:$0xff pattern:$0x75316420]
    %v279 = vsel %vm51, %v277, 0
    %v281 = vsel %vm51, %v278, 0
    %283 = vmatpush.msra.mxu0 0.0
    %284 = vmatpush.msra.mxu0 0.0
    %285 = vmatpush.msra.mxu0 0.0
    %286 = vmatpush.msra.mxu0 0.0
    %287 = vmatpush.msra.mxu0 0.0
    %288 = vmatpush.msra.mxu0 0.0
    %289 = vmatpush.msra.mxu0 0.0
    %290 = vmatpush.msra.mxu0 0.0
    %291 = vmatpush.msra.mxu0 0.0
    %292 = vmatpush.msra.mxu0 0.0
    %293 = vmatpush.msra.mxu0 0.0
    %294 = vmatpush.msra.mxu0 0.0
    %295 = vmatpush.msra.mxu0 0.0
    %296 = vmatpush.msra.mxu0 0.0
    %297 = vmatpush.msra.mxu0 0.0
    %298 = vmatpush.msra.mxu0 %v279
    %299 = vmatmul.f32.gmra.mxu0 %v46
    %v300 = vpop.f32.mrf.mxu0
    %v301 = vadd.f32 0.0, %v300
    %302 = vmatmul.f32.gmra.mxu0 %v49
    %v303 = vpop.f32.mrf.mxu0
    %v304 = vadd.f32 0.0, %v303
    %305 = vdwg.mxu0
    %306 = vmatpush.msra.mxu0 0.0
    %307 = vmatpush.msra.mxu0 0.0
    %308 = vmatpush.msra.mxu0 0.0
    %309 = vmatpush.msra.mxu0 0.0
    %310 = vmatpush.msra.mxu0 0.0
    %311 = vmatpush.msra.mxu0 0.0
    %312 = vmatpush.msra.mxu0 0.0
    %313 = vmatpush.msra.mxu0 0.0
    %314 = vmatpush.msra.mxu0 0.0
    %315 = vmatpush.msra.mxu0 0.0
    %316 = vmatpush.msra.mxu0 0.0
    %317 = vmatpush.msra.mxu0 0.0
    %318 = vmatpush.msra.mxu0 0.0
    %319 = vmatpush.msra.mxu0 0.0
    %320 = vmatpush.msra.mxu0 0.0
    %321 = vmatpush.msra.mxu0 %v281
    %322 = vmatmul.f32.gmra.mxu0 %v46
    %v323 = vpop.f32.mrf.mxu0
    %v324 = vadd.f32 0.0, %v323
    %325 = vmatmul.f32.gmra.mxu0 %v49
    %v326 = vpop.f32.mrf.mxu0
    %v327 = vadd.f32 0.0, %v326
    %328 = vdwg.mxu0
    %329 = vmatpush.msra.mxu0 0.0
    %330 = vmatpush.msra.mxu0 0.0
    %331 = vmatpush.msra.mxu0 0.0
    %332 = vmatpush.msra.mxu0 0.0
    %333 = vmatpush.msra.mxu0 0.0
    %334 = vmatpush.msra.mxu0 0.0
    %335 = vmatpush.msra.mxu0 0.0
    %336 = vmatpush.msra.mxu0 0.0
    %337 = vmatpush.msra.mxu0 0.0
    %338 = vmatpush.msra.mxu0 0.0
    %339 = vmatpush.msra.mxu0 0.0
    %340 = vmatpush.msra.mxu0 0.0
    %341 = vmatpush.msra.mxu0 0.0
    %342 = vmatpush.msra.mxu0 0.0
    %343 = vmatpush.msra.mxu0 0.0
    %344 = vmatpush.msra.mxu0 %v271
    %345 = vmatmul.f32.gmra.mxu0 %v104
    %v346 = vpop.f32.mrf.mxu0
    %v347 = vadd.f32 %v301, %v346
    %348 = vmatmul.f32.gmra.mxu0 %v107
    %v349 = vpop.f32.mrf.mxu0
    %v350 = vadd.f32 %v304, %v349
    %351 = vdwg.mxu0
    %352 = vmatpush.msra.mxu0 0.0
    %353 = vmatpush.msra.mxu0 0.0
    %354 = vmatpush.msra.mxu0 0.0
    %355 = vmatpush.msra.mxu0 0.0
    %356 = vmatpush.msra.mxu0 0.0
    %357 = vmatpush.msra.mxu0 0.0
    %358 = vmatpush.msra.mxu0 0.0
    %359 = vmatpush.msra.mxu0 0.0
    %360 = vmatpush.msra.mxu0 0.0
    %361 = vmatpush.msra.mxu0 0.0
    %362 = vmatpush.msra.mxu0 0.0
    %363 = vmatpush.msra.mxu0 0.0
    %364 = vmatpush.msra.mxu0 0.0
    %365 = vmatpush.msra.mxu0 0.0
    %366 = vmatpush.msra.mxu0 0.0
    %367 = vmatpush.msra.mxu0 %v272
    %368 = vmatmul.f32.gmra.mxu0 %v104
    %v369 = vpop.f32.mrf.mxu0
    %v370 = vadd.f32 %v324, %v369
    %371 = vmatmul.f32.gmra.mxu0 %v107
    %v372 = vpop.f32.mrf.mxu0
    %v373 = vadd.f32 %v327, %v372
    %374 = vdwg.mxu0
    %v375 = vadd.f32 %v347, %v158
    %v376 = vadd.f32 %v370, %v158
    %v377 = vadd.f32 %v350, %v163
    %v378 = vadd.f32 %v373, %v163
    %v379 = vmax.f32 %v375, 0.0
    %v380 = vmax.f32 %v376, 0.0
    %v381 = vmax.f32 %v377, 0.0
    %v382 = vmax.f32 %v378, 0.0
    %383 = vmatpush.msra.mxu0 0.0
    %384 = vmatpush.msra.mxu0 0.0
    %385 = vmatpush.msra.mxu0 0.0
    %386 = vmatpush.msra.mxu0 0.0
    %387 = vmatpush.msra.mxu0 0.0
    %388 = vmatpush.msra.mxu0 0.0
    %389 = vmatpush.msra.mxu0 0.0
    %390 = vmatpush.msra.mxu0 0.0
    %391 = vmatpush.msra.mxu0 0.0
    %392 = vmatpush.msra.mxu0 0.0
    %393 = vmatpush.msra.mxu0 0.0
    %394 = vmatpush.msra.mxu0 0.0
    %395 = vmatpush.msra.mxu0 0.0
    %396 = vmatpush.msra.mxu0 0.0
    %397 = vmatpush.msra.mxu0 %v381
    %398 = vmatpush.msra.mxu0 %v379
    %399 = vmatmul.f32.gmra.mxu0 %v181
    %v400 = vpop.f32.mrf.mxu0
    %v401 = vadd.f32 %v178, %v400
    %402 = vdwg.mxu0
    %403 = vmatpush.msra.mxu0 0.0
    %404 = vmatpush.msra.mxu0 0.0
    %405 = vmatpush.msra.mxu0 0.0
    %406 = vmatpush.msra.mxu0 0.0
    %407 = vmatpush.msra.mxu0 0.0
    %408 = vmatpush.msra.mxu0 0.0
    %409 = vmatpush.msra.mxu0 0.0
    %410 = vmatpush.msra.mxu0 0.0
    %411 = vmatpush.msra.mxu0 0.0
    %412 = vmatpush.msra.mxu0 0.0
    %413 = vmatpush.msra.mxu0 0.0
    %414 = vmatpush.msra.mxu0 0.0
    %415 = vmatpush.msra.mxu0 0.0
    %416 = vmatpush.msra.mxu0 0.0
    %417 = vmatpush.msra.mxu0 %v382
    %418 = vmatpush.msra.mxu0 %v380
    %419 = vmatmul.f32.gmra.mxu0 %v181
    %v420 = vpop.f32.mrf.mxu0
    %v421 = vadd.f32 %v178, %v420
    %422 = vdwg.mxu0
    %v423 = vxor.u32 %v401, 2147483648
    %v424 = vxor.u32 %v421, 2147483648
    %v425 = vmul.f32 %v423, 1.442695
    %v426 = vpow.pop %v425
    %v427 = vmul.f32 %v424, 1.442695
    %v428 = vpow.pop %v427
    %v429 = vadd.f32 %v426, 1.0
    %v430 = vadd.f32 %v428, 1.0
    %v431 = vrcp.pop %v429
    %v432 = vmul.f32 %v429, %v431
    %v433 = vsub.f32 1.0, %v432
    %v434 = vmul.f32 %v431, %v433
    %v435 = vadd.f32 %v431, %v434
    %vm436 = vweird.f32 %v429
    %vm437 = vweird.f32 %v431
    %vm438 = vmor %vm436, %vm437
    %v439 = vsel %vm438, %v431, %v435
    %v440 = vand.u32 2147483647, %v429
    %vm441 = vcmp.eq.f32.partialorder %v440, 8.507059e+37
    %v442 = vand.u32 %v429, 2147483648
    %v443 = vor.u32 1.1754944e-38, %v442
    %v444 = vsel %vm441, %v443, %v439
    %v445 = vmul.f32 1.0, %v444
    %v446 = vrcp.pop %v430
    %v447 = vmul.f32 %v430, %v446
    %v448 = vsub.f32 1.0, %v447
    %v449 = vmul.f32 %v446, %v448
    %v450 = vadd.f32 %v446, %v449
    %vm451 = vweird.f32 %v430
    %vm452 = vweird.f32 %v446
    %vm453 = vmor %vm451, %vm452
    %v454 = vsel %vm453, %v446, %v450
    %v455 = vand.u32 2147483647, %v430
    %vm456 = vcmp.eq.f32.partialorder %v455, 8.507059e+37
    %v457 = vand.u32 %v430, 2147483648
    %v458 = vor.u32 1.1754944e-38, %v457
    %v459 = vsel %vm456, %v458, %v454
    %v460 = vmul.f32 1.0, %v459
    %v461 = vperm.slane %v445, 0
    %v462 = vperm.slane %v460, 0
    %v465 = vrot.slane %v462, 4
    %v466 = vsel %vm51, %v461, %v465
    %v468 = vmul.f32 %v274, %v466
    %s469 = scalar_lea.vmem [#allocation3], 8
    %470 = vst [vmem:[%s469] sm:$0xff] %v468
    // Predicated region
    $region30: #{tpu_custom_call.1} parent=1 // pred_check
      _
    $region31: #{tpu_custom_call.1} parent=1 // pred_check_branch
      %472 = sbr.rel (0) target = $region33
    $region32: #{tpu_custom_call.1} parent=1 // pred_region
      %474 = vsyncadd [#allocation4], 0
      %s475 = sshll.u32 [#allocation3], 4
      %s476 = int_to_ptr.vmem [resolvable:$true] %s475
      %s477 = sshll.u32 %s7, 4
      %s478 = int_to_ptr.hbm [resolvable:$true] %s477
      %483 = dma.vmem_to_hbm [thread:$0]  %s476, 256, %s478, [#allocation4], 128, 128, 8
    $region33: #{tpu_custom_call.1} parent=1 // pred_fallthru
      _
    // Predicated region
    $region34: #{tpu_custom_call.1} parent=1 // pred_check
      _
    $region35: #{tpu_custom_call.1} parent=1 // pred_check_branch
      %485 = sbr.rel (0) target = $region37
    $region36: #{tpu_custom_call.1} parent=1 // pred_region
      %487 = dma.done [#allocation4], 256
    $region37: #{tpu_custom_call.1} parent=1 // pred_fallthru
      _
    %488 = vsyncpa [#allocation4], 1

</llo_original>
